<compile_context>
chip_gen: v7x
topology: tpu7x:2x2x1
jax: 0.10.0
libtpu: 0.0.40
codegen_flags: <defaults>
</compile_context>

<pallas_src>
import functools

import jax
import jax.numpy as jnp
from jax.experimental import pallas as pl
from jax.experimental.pallas import tpu as pltpu


def _round_up(x, m):
    return (x + m - 1) // m * m


def _embed_kernel(x_ref, w_ref, pos_ref, o_ref):
    # x_ref:   (TM, Kp)  bf16 patch tile for (batch b, patch-tile nt)
    # w_ref:   (Kp, Dp)  bf16 flattened conv weight (grid-invariant, stays resident)
    # pos_ref: (TM, Dp)  bf16 position embedding with conv bias folded in
    # o_ref:   (TM, Dp)  output tile (original activation dtype), lane-dense
    acc = jnp.dot(x_ref[...], w_ref[...], preferred_element_type=jnp.float32)
    # Epilogue add in f32 (v5e VPU has no bf16); single cast at the store.
    o_ref[...] = (acc + pos_ref[...].astype(jnp.float32)).astype(o_ref.dtype)


def siglip_vision_embeddings(pixel_values, conv_weight, conv_bias, pos_embedding,
                             patch_size, *, compute_dtype=jnp.bfloat16,
                             tm_target=256):
    """pixel_values: (B, C, H, W)   conv_weight: (D, C, P, P)
       conv_bias: (D,)              pos_embedding: (N, D), N = (H//P)*(W//P)
       returns (B, N, D) in pixel_values.dtype."""
    B, C, H, W = pixel_values.shape
    D = conv_weight.shape[0]
    P = patch_size
    assert H % P == 0 and W % P == 0, "image size must be a multiple of patch_size"
    Hp, Wp = H // P, W // P
    N = Hp * Wp
    K = C * P * P

    # --- patchify (pure data movement); downcast fused into the same copy ---
    # (B, C, Hp, P, Wp, P) -> (B, Hp, Wp, C, P, P) -> (B, N, K)  [(c,kh,kw) order]
    x = pixel_values.astype(compute_dtype).reshape(B, C, Hp, P, Wp, P)
    x = jnp.transpose(x, (0, 2, 4, 1, 3, 5)).reshape(B, N, K)

    # conv weight (D, C, P, P) -> (K, D); fold bias into the position table.
    w = conv_weight.reshape(D, K).T.astype(compute_dtype)
    pos_b = (pos_embedding.astype(jnp.float32)
             + conv_bias.astype(jnp.float32)[None, :]).astype(compute_dtype)

    # --- pad K (contraction) to a lane multiple (128) ---
    Kp = _round_up(K, 128)
    if Kp != K:
        x = jnp.pad(x, ((0, 0), (0, 0), (0, Kp - K)))
        w = jnp.pad(w, ((0, Kp - K), (0, 0)))

    # --- pad D to a lane multiple so output stores are unmasked full-lane vst ---
    Dp = _round_up(D, 128)
    if Dp != D:
        w = jnp.pad(w, ((0, 0), (0, Dp - D)))
        pos_b = jnp.pad(pos_b, ((0, 0), (0, Dp - D)))

    # --- pad N to a multiple of the MXU-aligned M tile ---
    N8 = _round_up(N, 8)
    TM = min(tm_target, N8)          # M tile (<=256), multiple of 8
    Nf = _round_up(N, TM)
    if Nf != N:
        x = jnp.pad(x, ((0, 0), (0, Nf - N), (0, 0)))
        pos_b = jnp.pad(pos_b, ((0, Nf - N), (0, 0)))
    NT = Nf // TM

    out_dtype = pixel_values.dtype
    bytes_accessed = (x.size * x.dtype.itemsize
                      + w.size * w.dtype.itemsize
                      + B * pos_b.size * pos_b.dtype.itemsize
                      + B * Nf * Dp * jnp.dtype(out_dtype).itemsize)

    out = pl.pallas_call(
        _embed_kernel,
        out_shape=jax.ShapeDtypeStruct((B, Nf, Dp), out_dtype),
        grid_spec=pl.GridSpec(
            grid=(B, NT),
            in_specs=[
                pl.BlockSpec((None, TM, Kp), lambda b, nt: (b, nt, 0)),  # patches
                pl.BlockSpec((Kp, Dp), lambda b, nt: (0, 0)),            # weight
                pl.BlockSpec((TM, Dp), lambda b, nt: (nt, 0)),           # pos+bias
            ],
            out_specs=pl.BlockSpec((None, TM, Dp), lambda b, nt: (b, nt, 0)),
        ),
        compiler_params=pltpu.CompilerParams(
            dimension_semantics=("parallel", "parallel")),
        cost_estimate=pl.CostEstimate(
            flops=2 * B * Nf * Kp * Dp,
            transcendentals=0,
            bytes_accessed=int(bytes_accessed)),
    )(x, w, pos_b)

    if Nf != N or Dp != D:
        out = out[:, :N, :D]
    return out


# ---------------------------------------------------------------------------
# References for verification.
# ---------------------------------------------------------------------------
def reference_kernel_math(pixel_values, conv_weight, conv_bias, pos_embedding,
                          patch_size, compute_dtype=jnp.bfloat16):
    """Plain-JAX mirror of the kernel math (bf16 inputs, f32 accumulation)."""
    B, C, H, W = pixel_values.shape
    D = conv_weight.shape[0]
    P = patch_size
    Hp, Wp = H // P, W // P
    N, K = Hp * Wp, C * P * P
    x = pixel_values.astype(compute_dtype).reshape(B, C, Hp, P, Wp, P)
    x = jnp.transpose(x, (0, 2, 4, 1, 3, 5)).reshape(B, N, K)
    w = conv_weight.reshape(D, K).T.astype(compute_dtype)
    pos_b = (pos_embedding.astype(jnp.float32)
             + conv_bias.astype(jnp.float32)[None, :]).astype(compute_dtype)
    acc = jnp.einsum("bnk,kd->bnd", x, w, preferred_element_type=jnp.float32)
    return (acc + pos_b[None].astype(jnp.float32)).astype(pixel_values.dtype)


def reference_module(pixel_values, conv_weight, conv_bias, pos_embedding, patch_size):
    """f32 reference mirroring the PyTorch forward exactly."""
    conv_out = jax.lax.conv_general_dilated(
        pixel_values, conv_weight,
        window_strides=(patch_size, patch_size),
        padding="VALID",
        dimension_numbers=("NCHW", "OIHW", "NCHW"),
    ) + conv_bias[None, :, None, None]
    B, D, Hp, Wp = conv_out.shape
    emb = conv_out.reshape(B, D, Hp * Wp).transpose(0, 2, 1)
    return emb + pos_embedding[None, :, :]


if __name__ == "__main__":
    # Small config consistent with the module: image_size=16, patch_size=4,
    # num_channels=4, hidden_size=32, batch=2  ->  num_patches=16, K=64.
    B, C, H, W = 2, 4, 16, 16
    P = 4
    D = 32
    N = (H // P) * (W // P)

    key = jax.random.PRNGKey(0)
    k_px, k_w, k_b, k_pos = jax.random.split(key, 4)
    pixel_values = jax.random.normal(k_px, (B, C, H, W), dtype=jnp.float32)
    conv_weight = jax.random.normal(k_w, (D, C, P, P), dtype=jnp.float32) * 0.02
    conv_bias = jax.random.normal(k_b, (D,), dtype=jnp.float32) * 0.02
    pos_embedding = jax.random.normal(k_pos, (N, D), dtype=jnp.float32) * 0.02

    fwd = jax.jit(functools.partial(siglip_vision_embeddings, patch_size=P))
    out = fwd(pixel_values, conv_weight, conv_bias, pos_embedding)
    jax.block_until_ready(out)
    assert out.shape == (B, N, D), out.shape

    # Tight check against a reference that mirrors the kernel's bf16/f32 math.
    ref_exact = reference_kernel_math(pixel_values, conv_weight, conv_bias,
                                      pos_embedding, P)
    assert jnp.allclose(out, ref_exact, atol=1e-4, rtol=1e-4), \
        "mismatch vs bf16-matched reference"

    # Loose sanity check against the exact f32 module semantics
    # (difference is only bf16 input quantization).
    ref_f32 = reference_module(pixel_values, conv_weight, conv_bias,
                               pos_embedding, P)
    max_err = float(jnp.max(jnp.abs(out - ref_f32)))
    assert max_err < 5e-2, f"too far from f32 module reference: {max_err}"

    print("KERNEL_OK")
</pallas_src>

<mosaic_0001>
module attributes {stable_mosaic.version = 11 : i64} {
  func.func @_embed_kernel(%arg0: i32, %arg1: i32, %arg2: memref<1x16x128xbf16, #tpu.memory_space<vmem>>, %arg3: memref<128x128xbf16, #tpu.memory_space<vmem>>, %arg4: memref<16x128xbf16, #tpu.memory_space<vmem>>, %arg5: memref<1x16x128xf32, #tpu.memory_space<vmem>>) attributes {dimension_semantics = [#tpu.dimension_semantics<parallel>, #tpu.dimension_semantics<parallel>], iteration_bounds = array<i64: 2, 1>, scalar_prefetch = 0 : i64, scratch_operands = 0 : i64, tpu.core_type = #tpu.core_type<tc>, window_params = [{transform_indices = @transform_0, window_bounds = array<i64: 1, 16, 128>}, {pipeline_mode = #tpu.pipeline_mode<synchronous>, transform_indices = @transform_1, window_bounds = array<i64: 128, 128>}, {transform_indices = @transform_2, window_bounds = array<i64: 16, 128>}, {transform_indices = @transform_3, window_bounds = array<i64: 1, 16, 128>}]} {
    %c0 = arith.constant 0 : index
    %c0_0 = arith.constant 0 : index
    %c0_1 = arith.constant 0 : index
    %0 = vector.load %arg2[%c0, %c0_0, %c0_1] : memref<1x16x128xbf16, #tpu.memory_space<vmem>>, vector<1x16x128xbf16>
    %1 = vector.shape_cast %0 : vector<1x16x128xbf16> to vector<16x128xbf16>
    %c0_2 = arith.constant 0 : index
    %c0_3 = arith.constant 0 : index
    %2 = vector.load %arg3[%c0_2, %c0_3] : memref<128x128xbf16, #tpu.memory_space<vmem>>, vector<128x128xbf16>
    %cst = arith.constant dense<0.000000e+00> : vector<16x128xf32>
    %3 = tpu.matmul %1, %2, %cst {dimension_numbers = #tpu.dot_dimension_numbers<[1], [0], [0], [1], [0, 0, 1, 1], [], []>} : vector<16x128xbf16>, vector<128x128xbf16>, vector<16x128xf32> -> vector<16x128xf32>
    %c0_4 = arith.constant 0 : index
    %c0_5 = arith.constant 0 : index
    %4 = vector.load %arg4[%c0_4, %c0_5] : memref<16x128xbf16, #tpu.memory_space<vmem>>, vector<16x128xbf16>
    %5 = arith.extf %4 : vector<16x128xbf16> to vector<16x128xf32>
    %6 = arith.addf %3, %5 : vector<16x128xf32>
    %c0_6 = arith.constant 0 : index
    %c0_7 = arith.constant 0 : index
    %c0_8 = arith.constant 0 : index
    %7 = vector.load %arg5[%c0_6, %c0_7, %c0_8] : memref<1x16x128xf32, #tpu.memory_space<vmem>>, vector<1x16x128xf32>
    %8 = vector.shape_cast %7 : vector<1x16x128xf32> to vector<16x128xf32>
    %9 = vector.shape_cast %6 : vector<16x128xf32> to vector<1x16x128xf32>
    tpu.vector_store %arg5[%c0_6, %c0_7, %c0_8], %9 {strides = array<i32>} : memref<1x16x128xf32, #tpu.memory_space<vmem>>, vector<1x16x128xf32>,
    return
  }
  func.func @transform_0(%arg0: i32, %arg1: i32) -> (i32, i32, i32) {
    %c0_i32 = arith.constant 0 : i32
    %c0_i32_0 = arith.constant 0 : i32
    return %arg0, %arg1, %c0_i32 : i32, i32, i32
  }
  func.func @transform_1(%arg0: i32, %arg1: i32) -> (i32, i32) {
    %c0_i32 = arith.constant 0 : i32
    %c0_i32_0 = arith.constant 0 : i32
    %c0_i32_1 = arith.constant 0 : i32
    return %c0_i32, %c0_i32_0 : i32, i32
  }
  func.func @transform_2(%arg0: i32, %arg1: i32) -> (i32, i32) {
    %c0_i32 = arith.constant 0 : i32
    %c0_i32_0 = arith.constant 0 : i32
    return %arg1, %c0_i32 : i32, i32
  }
  func.func @transform_3(%arg0: i32, %arg1: i32) -> (i32, i32, i32) {
    %c0_i32 = arith.constant 0 : i32
    %c0_i32_0 = arith.constant 0 : i32
    return %arg0, %arg1, %c0_i32 : i32, i32, i32
  }
}

</mosaic_0001>

<llo_original>
// kernel: siglip_vision_embeddings.1
$region0: #{siglip_vision_embeddings.1}
  #allocation0 [shape = 'u32[]', space=smem, size = 0x4, offset = 0x4, fixed_abs, tag = 'smem constant byte address 0x4 - core index']
  #allocation1 [shape = 'u32[144,128]{1,0:T(1,128)}', space=vmem, size = 0x12000, scoped, tag = 'internal scratch']
  %s0 = inlined_call_operand.vmem [shape: bf16[2,16,128], index: 0, kind: input, shape index: {}]
  %s1 = inlined_call_operand.vmem [shape: bf16[128,128], index: 1, kind: input, shape index: {}]
  %s2 = inlined_call_operand.vmem [shape: bf16[16,128], index: 2, kind: input, shape index: {}]
  %s3 = inlined_call_operand.hbm [shape: f32[2,16,128], index: 3, kind: output, shape index: {}]
  %s4 = sld [smem:[#allocation0]]
  $region45: #{siglip_vision_embeddings.1} parent=0
    _
  %s6 = ssub.s32 1, %s4
  %s7 = scalar_select 0, %s6, %s4
  $region1: #{siglip_vision_embeddings.1} parent=0
    #allocation2 [shape = 'u8[16384]{0}', space=vmem, size = 0x4000, scoped, tag = 'output window, operand 0']
    #allocation3 [shape = 's32[2]{0}', space=sflag, size = 0x8, scoped, tag = 'scoped memory for siglip_vision_embeddings.1']
    %8 = vsyncpa [#allocation3], 0
    %s9 = scalar_lea.sflag [#allocation3], 1
    %10 = vsyncpa %s9, 0
    loop: start=0, step=1, limit=4
    $region2: #{siglip_vision_embeddings.1} parent=1 // loop_pre_header
      _
    $region3: #{siglip_vision_embeddings.1} parent=1 // loop_header
      %s12 = sphi 0, %s16
      %p13 = scmp.ge.s32.totalorder %s12, 4
      %s19 = sphi 0, %s31
      %s20 = sphi 0, %s27
      %s21 = sphi 0, %s19
      %s22 = sphi 0, %s20
      %s23 = sphi 0, %s21
      %s24 = sphi 0, %s22
      %s36 = sphi 0, %s38
      %s39 = sphi 0, %s36
      %s40 = sphi 0, %s39
      %s56 = sphi 0, %s40
      %s60 = sphi 0, %s60
      %s62 = sphi 0, %s60
      %s63 = sphi 0, %s62
      %s77 = sphi 0, %s63
      %s83 = sphi 0, %s85
      %s86 = sphi 0, %s83
      %s87 = sphi 0, %s86
      %s103 = sphi 0, %s87
      %s111 = sphi 0, %s113
      %s114 = sphi 0, %s111
      %s115 = sphi 0, %s114
      %s131 = sphi 0, %s115
    $region4: #{siglip_vision_embeddings.1} parent=1 // loop_header_branch
      %15 = sbr.rel (%p13) target = $region8
    $region5: #{siglip_vision_embeddings.1} parent=1 // loop_body
      %s17 = ssub.s32 %s12, 1
      %s18 = ssub.s32 %s12, 2
      %s25 = sadd.s32 1, %s20
      %p26 = scmp.ge.s32.totalorder %s25, 1
      %s27 = scalar_select %p26, 0, %s25
      %s28 = sadd.s32 1, %s19
      %s29 = scalar_select %p26, %s28, %s19
      %p30 = scmp.ge.s32.totalorder %s29, 2
      %s31 = scalar_select %p30, 0, %s29
      %s32 = ssub.s32 %s19, %s31
      %s33 = ssub.s32 %s20, %s27
      %s34 = sor.u32 %s32, %s33
      %p35 = scmp.eq.s32.totalorder %s34, 0
      %s37 = sadd.s32 %s36, 1
      %s38 = scalar_select %p35, %s36, %s37
      %p41 = pneg %p35
      %p42 = scmp.eq.s32.totalorder %s12, 1
      %p43 = por %p41, %p42
      %p44 = scmp.ne.s32.totalorder %s36, %s39
      %p45 = scmp.eq.s32.totalorder %s12, 0
      %p46 = por %p44, %p45
      %p47 = scmp.ne.s32.totalorder %s36, %s39
      %p48 = scmp.eq.s32.totalorder %s17, 1
      %p49 = por %p47, %p48
      %p50 = scmp.ne.s32.totalorder %s39, %s40
      %p51 = scmp.eq.s32.totalorder %s17, 0
      %p52 = por %p50, %p51
      %p53 = scmp.ne.s32.totalorder %s39, %s40
      %p54 = scmp.eq.s32.totalorder %s18, 1
      %p55 = por %p53, %p54
      %p57 = scmp.ne.s32.totalorder %s40, %s56
      %p58 = scmp.eq.s32.totalorder %s18, 0
      %p59 = por %p57, %p58
      %s61 = sadd.s32 %s60, 1
      %p64 = scmp.eq.s32.totalorder %s12, 1
      %p65 = scmp.ne.s32.totalorder %s60, %s62
      %p66 = scmp.eq.s32.totalorder %s12, 0
      %p67 = por %p65, %p66
      %p68 = scmp.ne.s32.totalorder %s60, %s62
      %p69 = scmp.eq.s32.totalorder %s17, 1
      %p70 = por %p68, %p69
      %p71 = scmp.ne.s32.totalorder %s62, %s63
      %p72 = scmp.eq.s32.totalorder %s17, 0
      %p73 = por %p71, %p72
      %p74 = scmp.ne.s32.totalorder %s62, %s63
      %p75 = scmp.eq.s32.totalorder %s18, 1
      %p76 = por %p74, %p75
      %p78 = scmp.ne.s32.totalorder %s63, %s77
      %p79 = scmp.eq.s32.totalorder %s18, 0
      %p80 = por %p78, %p79
      %s81 = ssub.s32 %s20, %s27
      %p82 = scmp.eq.s32.totalorder %s81, 0
      %s84 = sadd.s32 %s83, 1
      %s85 = scalar_select %p82, %s83, %s84
      %p88 = pneg %p82
      %p89 = scmp.eq.s32.totalorder %s12, 1
      %p90 = por %p88, %p89
      %p91 = scmp.ne.s32.totalorder %s83, %s86
      %p92 = scmp.eq.s32.totalorder %s12, 0
      %p93 = por %p91, %p92
      %p94 = scmp.ne.s32.totalorder %s83, %s86
      %p95 = scmp.eq.s32.totalorder %s17, 1
      %p96 = por %p94, %p95
      %p97 = scmp.ne.s32.totalorder %s86, %s87
      %p98 = scmp.eq.s32.totalorder %s17, 0
      %p99 = por %p97, %p98
      %p100 = scmp.ne.s32.totalorder %s86, %s87
      %p101 = scmp.eq.s32.totalorder %s18, 1
      %p102 = por %p100, %p101
      %p104 = scmp.ne.s32.totalorder %s87, %s103
      %p105 = scmp.eq.s32.totalorder %s18, 0
      %p106 = por %p104, %p105
      %s107 = ssub.s32 %s19, %s31
      %s108 = ssub.s32 %s20, %s27
      %s109 = sor.u32 %s107, %s108
      %p110 = scmp.eq.s32.totalorder %s109, 0
      %s112 = sadd.s32 %s111, 1
      %s113 = scalar_select %p110, %s111, %s112
      %p116 = pneg %p110
      %p117 = scmp.eq.s32.totalorder %s12, 1
      %p118 = por %p116, %p117
      %p119 = scmp.ne.s32.totalorder %s111, %s114
      %p120 = scmp.eq.s32.totalorder %s12, 0
      %p121 = por %p119, %p120
      %p122 = scmp.ne.s32.totalorder %s111, %s114
      %p123 = scmp.eq.s32.totalorder %s17, 1
      %p124 = por %p122, %p123
      %p125 = scmp.ne.s32.totalorder %s114, %s115
      %p126 = scmp.eq.s32.totalorder %s17, 0
      %p127 = por %p125, %p126
      %p128 = scmp.ne.s32.totalorder %s114, %s115
      %p129 = scmp.eq.s32.totalorder %s18, 1
      %p130 = por %p128, %p129
      %p132 = scmp.ne.s32.totalorder %s115, %s131
      %p133 = scmp.eq.s32.totalorder %s18, 0
      %p134 = por %p132, %p133
      %p135 = scmp.le.s32.totalorder 1, %s12
      %p136 = scmp.lt.s32.totalorder %s12, 3
      %p137 = pnand %p135, %p136
      %p138 = pneg %p137
      // Predicated region
      $region9: #{siglip_vision_embeddings.1} parent=5 // pred_check
        _
      $region10: #{siglip_vision_embeddings.1} parent=5 // pred_check_branch
        %140 = sbr.rel (%p137) target = $region12
      $region11: #{siglip_vision_embeddings.1} parent=5 // pred_region
        %s141 = ssub.s32 %s12, 1
        // Predicated region
        $region13: #{siglip_vision_embeddings.1} parent=11 // pred_check
          %p142 = pneg %p73
        $region14: #{siglip_vision_embeddings.1} parent=11 // pred_check_branch
          %144 = sbr.rel (%p142) target = $region16
        $region15: #{siglip_vision_embeddings.1} parent=11 // pred_region
          _
        $region16: #{siglip_vision_embeddings.1} parent=11 // pred_fallthru
          _
        // Predicated region
        $region17: #{siglip_vision_embeddings.1} parent=11 // pred_check
          %p145 = pneg %p99
        $region18: #{siglip_vision_embeddings.1} parent=11 // pred_check_branch
          %147 = sbr.rel (%p145) target = $region20
        $region19: #{siglip_vision_embeddings.1} parent=11 // pred_region
          %s148 = smul.u32 2, %s22
          %p149 = scmp.lt.s32.totalorder %s148, 1
          %s150 = scalar_select %p149, %s148, 1
          %s151 = smul.addr %s150, 4
          %s152 = scalar_lea.vmem %s2, %s151
          %s153 = smul.u32 2, %s22
        $region20: #{siglip_vision_embeddings.1} parent=11 // pred_fallthru
          _
      $region12: #{siglip_vision_embeddings.1} parent=5 // pred_fallthru
        _
      %p154 = scmp.lt.s32.totalorder %s12, 2
      // Predicated region
      $region21: #{siglip_vision_embeddings.1} parent=5 // pred_check
        %p155 = pneg %p154
      $region22: #{siglip_vision_embeddings.1} parent=5 // pred_check_branch
        %157 = sbr.rel (%p155) target = $region24
      $region23: #{siglip_vision_embeddings.1} parent=5 // pred_region
        // Predicated region
        $region25: #{siglip_vision_embeddings.1} parent=23 // pred_check
          %p158 = pneg %p46
        $region26: #{siglip_vision_embeddings.1} parent=23 // pred_check_branch
          %160 = sbr.rel (%p158) target = $region28
        $region27: #{siglip_vision_embeddings.1} parent=23 // pred_region
          %s161 = smul.u32 2, %s20
          %p162 = scmp.lt.s32.totalorder %s19, 1
          %s163 = scalar_select %p162, %s19, 1
          %p164 = scmp.lt.s32.totalorder %s161, 1
          %s165 = scalar_select %p164, %s161, 1
          %s166 = smul.addr %s163, 2
          %s167 = sadd.s32 %s165, %s166
          %s168 = smul.addr %s167, 4
          %s169 = scalar_lea.vmem %s0, %s168
          %s170 = smul.u32 2, %s20
        $region28: #{siglip_vision_embeddings.1} parent=23 // pred_fallthru
          _
      $region24: #{siglip_vision_embeddings.1} parent=5 // pred_fallthru
        _
      %p171 = scmp.le.s32.totalorder 1, %s12
      %p172 = scmp.lt.s32.totalorder %s12, 3
      %p173 = pnand %p171, %p172
      %p174 = pneg %p173
      // Predicated region
      $region29: #{siglip_vision_embeddings.1} parent=5 // pred_check
        _
      $region30: #{siglip_vision_embeddings.1} parent=5 // pred_check_branch
        %176 = sbr.rel (%p173) target = $region32
      $region31: #{siglip_vision_embeddings.1} parent=5 // pred_region
        %s177 = ssub.s32 %s12, 1
        %s178 = smul.u32 2, %s22
        %p179 = scmp.lt.s32.totalorder %s21, 1
        %s180 = scalar_select %p179, %s21, 1
        %p181 = scmp.lt.s32.totalorder %s178, 1
        %s182 = scalar_select %p181, %s178, 1
        %s183 = smul.addr %s180, 2
        %s184 = sadd.s32 %s182, %s183
        %s185 = smul.addr %s184, 4
        %s186 = scalar_lea.vmem %s0, %s185
        %p187 = pneg %p52
        %p188 = pneg %p49
        %p189 = pneg %p73
        %p190 = pneg %p70
        %s191 = smul.u32 2, %s22
        %p192 = scmp.lt.s32.totalorder %s191, 1
        %s193 = scalar_select %p192, %s191, 1
        %s194 = smul.addr %s193, 4
        %s195 = scalar_lea.vmem %s2, %s194
        %p196 = pneg %p99
        %p197 = pneg %p96
        %p198 = pneg %p127
        %p199 = pneg %p124
        %s200 = sand.u32 %s114, 1
        %s201 = scalar_lea.sflag [#allocation3], %s200
        %s202 = sand.u32 %s114, 1
        %s203 = smul.addr %s202, 16
        %s204 = scalar_lea.vmem [#allocation2], %s203
        %s205 = smul.u32 2, %s22
        %p206 = scmp.lt.s32.totalorder %s21, 1
        %s207 = scalar_select %p206, %s21, 1
        %p208 = scmp.lt.s32.totalorder %s205, 1
        %s209 = scalar_select %p208, %s205, 1
        %s210 = smul.addr %s207, 2
        %s211 = sadd.s32 %s209, %s210
        %s212 = smul.addr %s211, 4
        %s213 = scalar_lea.vmem %s0, %s212
        %s214 = smul.u32 2, %s22
        %s215 = smul.u32 2, %s22
        %p216 = scmp.lt.s32.totalorder %s215, 1
        %s217 = scalar_select %p216, %s215, 1
        %s218 = smul.addr %s217, 4
        %s219 = scalar_lea.vmem %s2, %s218
        %s220 = smul.u32 2, %s22
        %s221 = smul.u32 2, %s22
        %v223 = vld [vmem:[%s213] sm:$0xf]
        %v224 = vld [vmem:[%s213 + $0x4] sm:$0xf]
        %v225 = vld [vmem:[%s1] sm:$0xf]
        %v226 = vld [vmem:[%s1 + $0x4] sm:$0xf]
        %v227 = vld [vmem:[%s1 + $0x8] sm:$0xf]
        %v228 = vld [vmem:[%s1 + $0xc] sm:$0xf]
        %v229 = vld [vmem:[%s1 + $0x10] sm:$0xf]
        %v230 = vld [vmem:[%s1 + $0x14] sm:$0xf]
        %v231 = vld [vmem:[%s1 + $0x18] sm:$0xf]
        %v232 = vld [vmem:[%s1 + $0x1c] sm:$0xf]
        %v233 = vld [vmem:[%s1 + $0x20] sm:$0xf]
        %v234 = vld [vmem:[%s1 + $0x24] sm:$0xf]
        %v235 = vld [vmem:[%s1 + $0x28] sm:$0xf]
        %v236 = vld [vmem:[%s1 + $0x2c] sm:$0xf]
        %v237 = vld [vmem:[%s1 + $0x30] sm:$0xf]
        %v238 = vld [vmem:[%s1 + $0x34] sm:$0xf]
        %v239 = vld [vmem:[%s1 + $0x38] sm:$0xf]
        %v240 = vld [vmem:[%s1 + $0x3c] sm:$0xf]
        %v241 = vld [vmem:[%s219] sm:$0xf]
        %v242 = vld [vmem:[%s219 + $0x4] sm:$0xf]
        %v243 = vunpack.c.l.bf16 %v241
        %v244 = vunpack.c.l.bf16 %v242
        %v247 = vunpack.c.l.b16 %v223
        %v248 = vunpack.c.l.b16 %v224
        %v249 = vpack.c.b16 %v248, %v247
        %v267 = vunpack.c.l.b16 %v225
        %v268 = vunpack.c.l.b16 %v226
        %v269 = vunpack.c.l.b16 %v227
        %v270 = vunpack.c.l.b16 %v228
        %v271 = vunpack.c.l.b16 %v229
        %v272 = vunpack.c.l.b16 %v230
        %v273 = vunpack.c.l.b16 %v231
        %v274 = vunpack.c.l.b16 %v232
        %v275 = vunpack.c.l.b16 %v233
        %v276 = vunpack.c.l.b16 %v234
        %v277 = vunpack.c.l.b16 %v235
        %v278 = vunpack.c.l.b16 %v236
        %v279 = vunpack.c.l.b16 %v237
        %v280 = vunpack.c.l.b16 %v238
        %v281 = vunpack.c.l.b16 %v239
        %v282 = vunpack.c.l.b16 %v240
        %v283 = vpack.c.b16 %v268, %v267
        %v284 = vpack.c.b16 %v270, %v269
        %v285 = vpack.c.b16 %v272, %v271
        %v286 = vpack.c.b16 %v274, %v273
        %v287 = vpack.c.b16 %v276, %v275
        %v288 = vpack.c.b16 %v278, %v277
        %v289 = vpack.c.b16 %v280, %v279
        %v290 = vpack.c.b16 %v282, %v281
        %299 = vmatprep.subr.bf16.mxu0 0
        %300 = vmatpush1.bf16.msra.mxu0 %v283
        %301 = vmatprep.subr.bf16.mxu0 0
        %302 = vmatpush1.bf16.msra.mxu0 %v284
        %303 = vmatprep.subr.bf16.mxu0 0
        %304 = vmatpush1.bf16.msra.mxu0 %v285
        %305 = vmatprep.subr.bf16.mxu0 0
        %306 = vmatpush1.bf16.msra.mxu0 %v286
        %307 = vmatprep.subr.bf16.mxu0 0
        %308 = vmatpush1.bf16.msra.mxu0 %v287
        %309 = vmatprep.subr.bf16.mxu0 0
        %310 = vmatpush1.bf16.msra.mxu0 %v288
        %311 = vmatprep.subr.bf16.mxu0 0
        %312 = vmatpush1.bf16.msra.mxu0 %v289
        %313 = vmatprep.subr.bf16.mxu0 0
        %314 = vmatpush1.bf16.msra.mxu0 %v290
        %315 = vmatprep.subr.bf16.mxu0 0
        %316 = vmatpush1.bf16.msra.mxu0 0
        %317 = vmatprep.subr.bf16.mxu0 0
        %318 = vmatpush1.bf16.msra.mxu0 0
        %319 = vmatprep.subr.bf16.mxu0 0
        %320 = vmatpush1.bf16.msra.mxu0 0
        %321 = vmatprep.subr.bf16.mxu0 0
        %322 = vmatpush1.bf16.msra.mxu0 0
        %323 = vmatprep.subr.bf16.mxu0 0
        %324 = vmatpush1.bf16.msra.mxu0 0
        %325 = vmatprep.subr.bf16.mxu0 0
        %326 = vmatpush1.bf16.msra.mxu0 0
        %327 = vmatprep.subr.bf16.mxu0 0
        %328 = vmatpush1.bf16.msra.mxu0 0
        %329 = vmatprep.subr.bf16.mxu0 0
        %330 = vmatpush1.bf16.msra.mxu0 0
        %331 = vmatprep.mubr.bf16.mxu0 0
        %332 = vmatmul.mubr.bf16.gmra.mrb[0].mxu0 %v249
        %v333 = vpop.f32.mrb[0].mxu0
        %v334 = vadd.f32 %v243, %v333
        %v335 = vpop.f32.mrb[0].mxu0
        %v336 = vpop.f32.mrb[0].mxu0
        %v337 = vadd.f32 %v244, %v336
        %v338 = vpop.f32.mrb[0].mxu0
        %339 = vdwg.mxu0
        %340 = vst [vmem:[%s204] sm:$0xff] %v334
        %341 = vst [vmem:[%s204 + $0x8] sm:$0xff] %v337
        %s342 = sand.u32 %s114, 1
        %s343 = scalar_lea.sflag [#allocation3], %s342
        %s344 = sand.u32 %s114, 1
        %s345 = smul.addr %s344, 16
        %s346 = scalar_lea.vmem [#allocation2], %s345
        // Predicated region
        $region33: #{siglip_vision_embeddings.1} parent=31 // pred_check
          %p347 = pneg %p124
        $region34: #{siglip_vision_embeddings.1} parent=31 // pred_check_branch
          %349 = sbr.rel (%p347) target = $region36
        $region35: #{siglip_vision_embeddings.1} parent=31 // pred_region
          %s350 = smul.u32 2, %s22
          %s352 = ssub.s32 256, 256
          %353 = vsyncadd %s343, %s352
          %s354 = smul.addr %s21, 2
          %s355 = sadd.s32 %s350, %s354
          %s356 = smul.addr %s355, 128
          %s357 = scalar_lea.hbm %s3, %s356
          %s358 = sshll.u32 %s346, 4
          %s359 = int_to_ptr.vmem [resolvable:$true] %s358
          %364 = dma.vmem_to_hbm [thread:$0]  %s359, 256, %s357, %s343, 128, 128, 8
        $region36: #{siglip_vision_embeddings.1} parent=31 // pred_fallthru
          _
      $region32: #{siglip_vision_embeddings.1} parent=5 // pred_fallthru
        _
      %p365 = scmp.le.s32.totalorder 2, %s12
      // Predicated region
      $region37: #{siglip_vision_embeddings.1} parent=5 // pred_check
        %p366 = pneg %p365
      $region38: #{siglip_vision_embeddings.1} parent=5 // pred_check_branch
        %368 = sbr.rel (%p366) target = $region40
      $region39: #{siglip_vision_embeddings.1} parent=5 // pred_region
        %s369 = ssub.s32 %s12, 2
        // Predicated region
        $region41: #{siglip_vision_embeddings.1} parent=39 // pred_check
          %p370 = pneg %p130
        $region42: #{siglip_vision_embeddings.1} parent=39 // pred_check_branch
          %372 = sbr.rel (%p370) target = $region44
        $region43: #{siglip_vision_embeddings.1} parent=39 // pred_region
          %s373 = sand.u32 %s115, 1
          %s374 = scalar_lea.sflag [#allocation3], %s373
          %s375 = sand.u32 %s115, 1
          %s376 = smul.addr %s375, 16
          %s377 = scalar_lea.vmem [#allocation2], %s376
          %378 = dma.done %s374, 256
        $region44: #{siglip_vision_embeddings.1} parent=39 // pred_fallthru
          _
      $region40: #{siglip_vision_embeddings.1} parent=5 // pred_fallthru
        _
    $region6: #{siglip_vision_embeddings.1} parent=1 // loop_footer
      %s16 = sadd.s32 1, %s12
    $region7: #{siglip_vision_embeddings.1} parent=1 // loop_footer_branch
      %11 = sbr.rel target = $region3
    $region8: #{siglip_vision_embeddings.1} parent=1 // loop_exit
      _
    %379 = vsyncpa [#allocation3], 1
    %s380 = scalar_lea.sflag [#allocation3], 1
    %381 = vsyncpa %s380, 1

</llo_original>
